<compile_context>
chip_gen: v7x
topology: tpu7x:2x2x1
jax: 0.10.0
libtpu: 0.0.40
codegen_flags: <defaults>
</compile_context>

<pallas_src>
import functools

import jax
import jax.numpy as jnp
import numpy as np
from jax.experimental import pallas as pl
from jax.experimental.pallas import tpu as pltpu


# ---------------------------------------------------------------------------
# Generation-aware sizing.
# ---------------------------------------------------------------------------
def _vmem_capacity_bytes():
    try:
        return int(pltpu.get_tpu_info().vmem_capacity_bytes)
    except Exception:
        return 64 * 1024 * 1024          # conservative default (v7x per-TC budget)


_VMEM_CAP = _vmem_capacity_bytes()
_VMEM_LIMIT = int(min(_VMEM_CAP * 3 // 4, 96 * 1024 * 1024))   # ~75% of physical, capped
_SMALL_VMEM = _VMEM_CAP < 96 * 1024 * 1024                     # v7x-class budget

_ROW_TILES = (256, 128, 64, 32, 16, 8) if _SMALL_VMEM else (512, 256, 128, 64, 32, 16, 8)
_HEAD_TILES = (4, 2, 1) if _SMALL_VMEM else (8, 4, 2, 1)
_COL_TILES = (256, 128) if _SMALL_VMEM else (512, 256, 128)
_Q_TILES = (256, 128, 64, 32, 16, 8)
_K_TILES = (128, 64, 32, 16, 8)          # tk < tq keeps the f32 score tile small
_WEIGHT_RESIDENT_BYTES = _VMEM_LIMIT // 8   # keep a weight fully resident only below this


def _pick_tile(n, candidates):
    """Largest candidate that divides n; falls back to n (full extent)."""
    for c in candidates:
        if c <= n and n % c == 0:
            return c
    return n


# ---------------------------------------------------------------------------
# One-time parameter packing (hoisted out of the per-forward wrapper).
# ---------------------------------------------------------------------------
def prepare_params(params, mma_dtype=jnp.float32):
    p = dict(params)
    p["w_qkv"] = jnp.stack([params["wq"], params["wk"], params["wv"]]).astype(mma_dtype)
    p["b_qkv"] = jnp.stack([params["bq"], params["bk"], params["bv"]]).astype(jnp.float32)
    p["w_fc_mma"] = params["w_fc"].astype(mma_dtype)
    return p


# ---------------------------------------------------------------------------
# Kernel 1a: fused QKV projection, whole [3,M,M] weight stack resident.
# ---------------------------------------------------------------------------
def qkv_proj_resident_kernel(x_ref, w_ref, b_ref, q_ref, k_ref, v_ref, *, mma_dtype):
    x = x_ref[...].astype(mma_dtype)
    for j, out_ref in enumerate((q_ref, k_ref, v_ref)):
        acc = jnp.dot(x, w_ref[j], preferred_element_type=jnp.float32) + b_ref[j]
        out_ref[...] = acc.astype(out_ref.dtype)


# ---------------------------------------------------------------------------
# Kernel 1b: fused QKV projection, weight streamed as (M, tcol) column tiles.
#   grid = (N//tile_n, M//tcol, 3); the q/k/v selector j is innermost ("arbitrary"),
#   so each output block (i, c) is written exactly once before its index changes.
# ---------------------------------------------------------------------------
def qkv_proj_tiled_kernel(x_ref, w_ref, b_ref, q_ref, k_ref, v_ref, *, mma_dtype):
    j = pl.program_id(2)                      # 0 = Q, 1 = K, 2 = V
    x = x_ref[...].astype(mma_dtype)
    acc = jnp.dot(x, w_ref[0], preferred_element_type=jnp.float32) + b_ref[0]
    out = acc.astype(q_ref.dtype)

    @pl.when(j == 0)
    def _():
        q_ref[...] = out

    @pl.when(j == 1)
    def _():
        k_ref[...] = out

    @pl.when(j == 2)
    def _():
        v_ref[...] = out


# ---------------------------------------------------------------------------
# Kernel 2: flash-style attention over the [BH, L, D] head layout.
#   grid = (BH // hb, L // tq, L // tk); kv axis is the sequential reduction.
# ---------------------------------------------------------------------------
def flash_attn_kernel(q_ref, k_ref, v_ref, o_ref, m_sc, l_sc, acc_sc, q_sc,
                      *, scale, mma_dtype, exp_in_bf16):
    kv = pl.program_id(2)

    @pl.when(kv == 0)
    def _():
        m_sc[...] = jnp.full_like(m_sc, -jnp.inf)
        l_sc[...] = jnp.zeros_like(l_sc)
        acc_sc[...] = jnp.zeros_like(acc_sc)
        # scale + cast of Q hoisted out of the kv loop (reused for all kv tiles).
        q_sc[...] = (q_ref[...] * scale).astype(mma_dtype)

    k = k_ref[...].astype(mma_dtype)
    # Contract the last dims directly: no materialized K^T (no XLU transpose).
    s = jnp.einsum("hqd,hkd->hqk", q_sc[...], k, preferred_element_type=jnp.float32)

    m_prev = m_sc[...]
    m_new = jnp.maximum(m_prev, jnp.max(s, axis=-1, keepdims=True))
    alpha = jnp.exp(m_prev - m_new)
    if exp_in_bf16:
        # bf16 exp ~doubles EUP throughput on v6e/v7x; l stays accumulated in f32.
        p_mma = jnp.exp((s - m_new).astype(jnp.bfloat16))
        p_sum = jnp.sum(p_mma.astype(jnp.float32), axis=-1, keepdims=True)
    else:
        p_f32 = jnp.exp(s - m_new)
        p_mma = p_f32.astype(mma_dtype)
        p_sum = jnp.sum(p_f32, axis=-1, keepdims=True)

    l_sc[...] = alpha * l_sc[...] + p_sum
    acc_sc[...] = alpha * acc_sc[...] + jnp.einsum(
        "hqk,hkd->hqd", p_mma, v_ref[...].astype(mma_dtype),
        preferred_element_type=jnp.float32)
    m_sc[...] = m_new

    @pl.when(kv == pl.num_programs(2) - 1)
    def _():
        inv_l = pl.reciprocal(l_sc[...], approx=True)   # EUP slot, effectively free
        o_ref[...] = (acc_sc[...] * inv_l).astype(o_ref.dtype)


# ---------------------------------------------------------------------------
# Kernel 3: output projection (contraction dim tiled, f32 accumulator)
#           + residual + LayerNorm finalized at the last reduction step.
# ---------------------------------------------------------------------------
def out_ln_kernel(ctx_ref, x_ref, w_ref, b_ref, g_ref, beta_ref, o_ref, acc_sc,
                  *, eps, mma_dtype):
    k = pl.program_id(1)

    @pl.when(k == 0)
    def _():
        acc_sc[...] = jnp.zeros_like(acc_sc)

    acc_sc[...] += jnp.dot(ctx_ref[...].astype(mma_dtype), w_ref[...],
                           preferred_element_type=jnp.float32)

    @pl.when(k == pl.num_programs(1) - 1)
    def _():
        out = acc_sc[...] + b_ref[...] + x_ref[...]                       # bias + residual
        mean = jnp.mean(out, axis=-1, keepdims=True)
        var = jnp.mean(jnp.square(out - mean), axis=-1, keepdims=True)    # biased var (PyTorch LN)
        norm = (out - mean) * jax.lax.rsqrt(var + eps)
        o_ref[...] = (norm * g_ref[...] + beta_ref[...]).astype(o_ref.dtype)


# ---------------------------------------------------------------------------
# Wrapper
# ---------------------------------------------------------------------------
def multi_head_attention(x, params, num_head, mma_dtype=jnp.float32,
                         out_dtype=None, exp_in_bf16=None, qkv_weight_resident=None):
    B, L, M = x.shape
    assert M % num_head == 0
    dim_head = M // num_head
    N = B * L
    x2d = x.reshape(N, M)
    out_dtype = x.dtype if out_dtype is None else out_dtype
    if exp_in_bf16 is None:
        # bf16 exp is the v6e/v7x production setting; pass exp_in_bf16=False on v5e
        # (its EUP has no bf16 path, so the cast would be pure overhead).
        exp_in_bf16 = (jnp.dtype(mma_dtype) == jnp.dtype(jnp.bfloat16))
    mma_bytes = jnp.dtype(mma_dtype).itemsize

    tile_n = _pick_tile(N, _ROW_TILES)

    # --- 1) fused QKV projection ----------------------------------------------
    if qkv_weight_resident is None:
        qkv_weight_resident = (3 * M * M * mma_bytes) <= _WEIGHT_RESIDENT_BYTES

    if qkv_weight_resident:
        row_spec = pl.BlockSpec((tile_n, M), lambda i: (i, 0))
        q2d, k2d, v2d = pl.pallas_call(
            functools.partial(qkv_proj_resident_kernel, mma_dtype=mma_dtype),
            out_shape=(jax.ShapeDtypeStruct((N, M), mma_dtype),) * 3,
            grid=(N // tile_n,),
            in_specs=[row_spec,
                      pl.BlockSpec((3, M, M), lambda i: (0, 0, 0)),
                      pl.BlockSpec((3, 1, M), lambda i: (0, 0, 0))],
            out_specs=(row_spec, row_spec, row_spec),
            compiler_params=pltpu.CompilerParams(
                dimension_semantics=("parallel",),
                vmem_limit_bytes=_VMEM_LIMIT),
        )(x2d, params["w_qkv"], params["b_qkv"])
    else:
        # TODO(synk): for extremely large M also tile the contraction dim of x here
        # (K-reduction axis + f32 accumulator), analogous to kernel 3.
        tcol = _pick_tile(M, _COL_TILES)
        x_spec = pl.BlockSpec((tile_n, M), lambda i, c, j: (i, 0))
        out_spec = pl.BlockSpec((tile_n, tcol), lambda i, c, j: (i, c))
        q2d, k2d, v2d = pl.pallas_call(
            functools.partial(qkv_proj_tiled_kernel, mma_dtype=mma_dtype),
            out_shape=(jax.ShapeDtypeStruct((N, M), mma_dtype),) * 3,
            grid=(N // tile_n, M // tcol, 3),
            in_specs=[x_spec,
                      pl.BlockSpec((1, M, tcol), lambda i, c, j: (j, 0, c)),
                      pl.BlockSpec((1, 1, tcol), lambda i, c, j: (j, 0, c))],
            out_specs=(out_spec, out_spec, out_spec),
            compiler_params=pltpu.CompilerParams(
                dimension_semantics=("parallel", "parallel", "arbitrary"),
                vmem_limit_bytes=_VMEM_LIMIT),
        )(x2d, params["w_qkv"], params["b_qkv"])

    # --- exact PyTorch .view(B*H, -1, D) head split (row-major, no permute) ----
    BH = B * num_head
    Q = q2d.reshape(BH, -1, dim_head)
    K = k2d.reshape(BH, -1, dim_head)
    V = v2d.reshape(BH, -1, dim_head)
    Lq = Q.shape[1]
    scale = float(dim_head) ** (-0.5)

    # --- 2) flash attention -----------------------------------------------------
    hb = _pick_tile(BH, _HEAD_TILES)
    tq = _pick_tile(Lq, _Q_TILES)
    tk = _pick_tile(Lq, _K_TILES)

    q_spec = pl.BlockSpec((hb, tq, dim_head), lambda b, qi, ki: (b, qi, 0))
    kv_spec = pl.BlockSpec((hb, tk, dim_head), lambda b, qi, ki: (b, ki, 0))
    context = pl.pallas_call(
        functools.partial(flash_attn_kernel, scale=scale, mma_dtype=mma_dtype,
                          exp_in_bf16=exp_in_bf16),
        out_shape=jax.ShapeDtypeStruct((BH, Lq, dim_head), mma_dtype),
        grid=(BH // hb, Lq // tq, Lq // tk),
        in_specs=[q_spec, kv_spec, kv_spec],
        out_specs=q_spec,
        scratch_shapes=[pltpu.VMEM((hb, tq, 1), jnp.float32),
                        pltpu.VMEM((hb, tq, 1), jnp.float32),
                        pltpu.VMEM((hb, tq, dim_head), jnp.float32),
                        pltpu.VMEM((hb, tq, dim_head), mma_dtype)],
        compiler_params=pltpu.CompilerParams(
            dimension_semantics=("parallel", "parallel", "arbitrary"),
            vmem_limit_bytes=_VMEM_LIMIT),
    )(Q, K, V)

    # --- PyTorch .view(B, -1, H*D), then flatten rows for the final matmul -----
    ctx2d = context.reshape(B, -1, dim_head * num_head).reshape(N, M)

    # --- 3) out projection (tiled contraction) + residual + LayerNorm ----------
    if (M * M * mma_bytes) <= _WEIGHT_RESIDENT_BYTES:
        tkc = M                                   # whole w_fc stays resident (index map constant)
    else:
        tkc = _pick_tile(M, _COL_TILES)           # stream (tkc, M) weight slabs
    row3 = pl.BlockSpec((tile_n, M), lambda i, k: (i, 0))
    vec3 = pl.BlockSpec((1, M), lambda i, k: (0, 0))
    out2d = pl.pallas_call(
        functools.partial(out_ln_kernel, eps=1e-5, mma_dtype=mma_dtype),
        out_shape=jax.ShapeDtypeStruct((N, M), out_dtype),
        grid=(N // tile_n, M // tkc),
        in_specs=[pl.BlockSpec((tile_n, tkc), lambda i, k: (i, k)),
                  row3,
                  pl.BlockSpec((tkc, M), lambda i, k: (k, 0)),
                  vec3, vec3, vec3],
        out_specs=row3,
        scratch_shapes=[pltpu.VMEM((tile_n, M), jnp.float32)],
        compiler_params=pltpu.CompilerParams(
            dimension_semantics=("parallel", "arbitrary"),
            vmem_limit_bytes=_VMEM_LIMIT),
    )(ctx2d, x2d, params["w_fc_mma"], params["b_fc"], params["gamma"], params["beta"])

    return out2d.reshape(B, L, M)


# ---------------------------------------------------------------------------
# Pure-JAX reference (mirrors the PyTorch forward) for a sanity check.
# ---------------------------------------------------------------------------
def reference(x, params, num_head):
    B, L, M = x.shape
    D = M // num_head
    Q = x.reshape(-1, M) @ params["wq"] + params["bq"]
    K = x.reshape(-1, M) @ params["wk"] + params["bk"]
    V = x.reshape(-1, M) @ params["wv"] + params["bv"]
    Q = Q.reshape(B, L, M).reshape(B * num_head, -1, D)
    K = K.reshape(B, L, M).reshape(B * num_head, -1, D)
    V = V.reshape(B, L, M).reshape(B * num_head, -1, D)
    scale = float(D) ** (-0.5)
    att = jnp.einsum("bqd,bkd->bqk", Q, K) * scale
    att = jax.nn.softmax(att, axis=-1)
    ctx = jnp.einsum("bqk,bkd->bqd", att, V)
    ctx = ctx.reshape(B, -1, D * num_head)
    out = ctx.reshape(-1, M) @ params["w_fc"] + params["b_fc"]
    out = out.reshape(B, L, M) + x
    mean = jnp.mean(out, axis=-1, keepdims=True)
    var = jnp.mean((out - mean) ** 2, axis=-1, keepdims=True)
    out = (out - mean) / jnp.sqrt(var + 1e-5)
    return out * params["gamma"] + params["beta"]


if __name__ == "__main__":
    # Small, module-consistent shapes.
    B, L, dim_model, num_head = 2, 8, 32, 4

    key = jax.random.PRNGKey(0)
    ks = jax.random.split(key, 10)
    init = lambda k, shape, s=0.1: (s * jax.random.normal(k, shape)).astype(jnp.float32)

    raw_params = {
        # Linear weights stored as [in, out]; biases as [1, out] for in-kernel broadcast.
        "wq": init(ks[0], (dim_model, dim_model)),
        "wk": init(ks[1], (dim_model, dim_model)),
        "wv": init(ks[2], (dim_model, dim_model)),
        "bq": init(ks[3], (1, dim_model)),
        "bk": init(ks[4], (1, dim_model)),
        "bv": init(ks[5], (1, dim_model)),
        "w_fc": init(ks[6], (dim_model, dim_model)),
        "b_fc": init(ks[7], (1, dim_model)),
        "gamma": jnp.ones((1, dim_model), jnp.float32),
        "beta": jnp.zeros((1, dim_model), jnp.float32),
    }

    x = jax.random.normal(ks[8], (B, L, dim_model), dtype=jnp.float32)

    ref = jax.block_until_ready(reference(x, raw_params, num_head))

    # f32 MXU operands: tight check (resident-weight projection path).
    params_f32 = prepare_params(raw_params, mma_dtype=jnp.float32)
    out_f32 = jax.block_until_ready(multi_head_attention(x, params_f32, num_head))
    np.testing.assert_allclose(np.asarray(out_f32), np.asarray(ref), rtol=2e-3, atol=2e-3)

    # Same math but forcing the column-tiled / streamed-weight projection path
    # (the path taken automatically once 3*M*M no longer fits the VMEM budget).
    out_f32_tiled = jax.block_until_ready(
        multi_head_attention(x, params_f32, num_head, qkv_weight_resident=False))
    np.testing.assert_allclose(np.asarray(out_f32_tiled), np.asarray(ref), rtol=2e-3, atol=2e-3)

    # bf16 MXU operands + bf16 softmax exp, f32 accumulation (v6e/v7x production path).
    params_bf16 = prepare_params(raw_params, mma_dtype=jnp.bfloat16)
    out_bf16 = jax.block_until_ready(
        multi_head_attention(x, params_bf16, num_head, mma_dtype=jnp.bfloat16))
    np.testing.assert_allclose(np.asarray(out_bf16), np.asarray(ref), rtol=3e-2, atol=3e-2)

    print("KERNEL_OK")
</pallas_src>

<mosaic_0001>
module attributes {stable_mosaic.version = 11 : i64} {
  func.func @qkv_proj_resident_kernel(%arg0: i32, %arg1: memref<16x32xf32, #tpu.memory_space<vmem>>, %arg2: memref<3x32x32xf32, #tpu.memory_space<vmem>>, %arg3: memref<3x1x32xf32, #tpu.memory_space<vmem>>, %arg4: memref<16x32xf32, #tpu.memory_space<vmem>>, %arg5: memref<16x32xf32, #tpu.memory_space<vmem>>, %arg6: memref<16x32xf32, #tpu.memory_space<vmem>>) attributes {dimension_semantics = [#tpu.dimension_semantics<parallel>], iteration_bounds = array<i64: 1>, scalar_prefetch = 0 : i64, scratch_operands = 0 : i64, tpu.core_type = #tpu.core_type<tc>, window_params = [{transform_indices = @transform_0, window_bounds = array<i64: 16, 32>}, {pipeline_mode = #tpu.pipeline_mode<synchronous>, transform_indices = @transform_1, window_bounds = array<i64: 3, 32, 32>}, {pipeline_mode = #tpu.pipeline_mode<synchronous>, transform_indices = @transform_2, window_bounds = array<i64: 3, 1, 32>}, {transform_indices = @transform_3, window_bounds = array<i64: 16, 32>}, {transform_indices = @transform_4, window_bounds = array<i64: 16, 32>}, {transform_indices = @transform_5, window_bounds = array<i64: 16, 32>}]} {
    %c0 = arith.constant 0 : index
    %c0_0 = arith.constant 0 : index
    %0 = vector.load %arg1[%c0, %c0_0] : memref<16x32xf32, #tpu.memory_space<vmem>>, vector<16x32xf32>
    %c0_1 = arith.constant 0 : index
    %c0_2 = arith.constant 0 : index
    %c0_3 = arith.constant 0 : index
    %1 = vector.load %arg2[%c0_1, %c0_2, %c0_3] : memref<3x32x32xf32, #tpu.memory_space<vmem>>, vector<1x32x32xf32>
    %2 = vector.shape_cast %1 : vector<1x32x32xf32> to vector<32x32xf32>
    %cst = arith.constant dense<0.000000e+00> : vector<16x32xf32>
    %3 = tpu.matmul %0, %2, %cst {dimension_numbers = #tpu.dot_dimension_numbers<[1], [0], [0], [1], [0, 0, 1, 1], [], []>} : vector<16x32xf32>, vector<32x32xf32>, vector<16x32xf32> -> vector<16x32xf32>
    %c0_4 = arith.constant 0 : index
    %c0_5 = arith.constant 0 : index
    %c0_6 = arith.constant 0 : index
    %4 = vector.load %arg3[%c0_4, %c0_5, %c0_6] : memref<3x1x32xf32, #tpu.memory_space<vmem>>, vector<1x1x32xf32>
    %5 = vector.shape_cast %4 : vector<1x1x32xf32> to vector<1x32xf32>
    %6 = vector.broadcast %5 : vector<1x32xf32> to vector<16x32xf32>
    %7 = arith.addf %3, %6 : vector<16x32xf32>
    %c0_7 = arith.constant 0 : index
    %c0_8 = arith.constant 0 : index
    %8 = vector.load %arg4[%c0_7, %c0_8] : memref<16x32xf32, #tpu.memory_space<vmem>>, vector<16x32xf32>
    tpu.vector_store %arg4[%c0_7, %c0_8], %7 {strides = array<i32>} : memref<16x32xf32, #tpu.memory_space<vmem>>, vector<16x32xf32>,
    %c1 = arith.constant 1 : index
    %c0_9 = arith.constant 0 : index
    %c0_10 = arith.constant 0 : index
    %9 = vector.load %arg2[%c1, %c0_9, %c0_10] : memref<3x32x32xf32, #tpu.memory_space<vmem>>, vector<1x32x32xf32>
    %10 = vector.shape_cast %9 : vector<1x32x32xf32> to vector<32x32xf32>
    %cst_11 = arith.constant dense<0.000000e+00> : vector<16x32xf32>
    %11 = tpu.matmul %0, %10, %cst_11 {dimension_numbers = #tpu.dot_dimension_numbers<[1], [0], [0], [1], [0, 0, 1, 1], [], []>} : vector<16x32xf32>, vector<32x32xf32>, vector<16x32xf32> -> vector<16x32xf32>
    %c1_12 = arith.constant 1 : index
    %c0_13 = arith.constant 0 : index
    %c0_14 = arith.constant 0 : index
    %12 = vector.load %arg3[%c1_12, %c0_13, %c0_14] : memref<3x1x32xf32, #tpu.memory_space<vmem>>, vector<1x1x32xf32>
    %13 = vector.shape_cast %12 : vector<1x1x32xf32> to vector<1x32xf32>
    %14 = vector.broadcast %13 : vector<1x32xf32> to vector<16x32xf32>
    %15 = arith.addf %11, %14 : vector<16x32xf32>
    %c0_15 = arith.constant 0 : index
    %c0_16 = arith.constant 0 : index
    %16 = vector.load %arg5[%c0_15, %c0_16] : memref<16x32xf32, #tpu.memory_space<vmem>>, vector<16x32xf32>
    tpu.vector_store %arg5[%c0_15, %c0_16], %15 {strides = array<i32>} : memref<16x32xf32, #tpu.memory_space<vmem>>, vector<16x32xf32>,
    %c2 = arith.constant 2 : index
    %c0_17 = arith.constant 0 : index
    %c0_18 = arith.constant 0 : index
    %17 = vector.load %arg2[%c2, %c0_17, %c0_18] : memref<3x32x32xf32, #tpu.memory_space<vmem>>, vector<1x32x32xf32>
    %18 = vector.shape_cast %17 : vector<1x32x32xf32> to vector<32x32xf32>
    %cst_19 = arith.constant dense<0.000000e+00> : vector<16x32xf32>
    %19 = tpu.matmul %0, %18, %cst_19 {dimension_numbers = #tpu.dot_dimension_numbers<[1], [0], [0], [1], [0, 0, 1, 1], [], []>} : vector<16x32xf32>, vector<32x32xf32>, vector<16x32xf32> -> vector<16x32xf32>
    %c2_20 = arith.constant 2 : index
    %c0_21 = arith.constant 0 : index
    %c0_22 = arith.constant 0 : index
    %20 = vector.load %arg3[%c2_20, %c0_21, %c0_22] : memref<3x1x32xf32, #tpu.memory_space<vmem>>, vector<1x1x32xf32>
    %21 = vector.shape_cast %20 : vector<1x1x32xf32> to vector<1x32xf32>
    %22 = vector.broadcast %21 : vector<1x32xf32> to vector<16x32xf32>
    %23 = arith.addf %19, %22 : vector<16x32xf32>
    %c0_23 = arith.constant 0 : index
    %c0_24 = arith.constant 0 : index
    %24 = vector.load %arg6[%c0_23, %c0_24] : memref<16x32xf32, #tpu.memory_space<vmem>>, vector<16x32xf32>
    tpu.vector_store %arg6[%c0_23, %c0_24], %23 {strides = array<i32>} : memref<16x32xf32, #tpu.memory_space<vmem>>, vector<16x32xf32>,
    return
  }
  func.func @transform_0(%arg0: i32) -> (i32, i32) {
    %c0_i32 = arith.constant 0 : i32
    %c0_i32_0 = arith.constant 0 : i32
    return %arg0, %c0_i32 : i32, i32
  }
  func.func @transform_1(%arg0: i32) -> (i32, i32, i32) {
    %c0_i32 = arith.constant 0 : i32
    %c0_i32_0 = arith.constant 0 : i32
    %c0_i32_1 = arith.constant 0 : i32
    %c0_i32_2 = arith.constant 0 : i32
    return %c0_i32, %c0_i32_0, %c0_i32_1 : i32, i32, i32
  }
  func.func @transform_2(%arg0: i32) -> (i32, i32, i32) {
    %c0_i32 = arith.constant 0 : i32
    %c0_i32_0 = arith.constant 0 : i32
    %c0_i32_1 = arith.constant 0 : i32
    %c0_i32_2 = arith.constant 0 : i32
    return %c0_i32, %c0_i32_0, %c0_i32_1 : i32, i32, i32
  }
  func.func @transform_3(%arg0: i32) -> (i32, i32) {
    %c0_i32 = arith.constant 0 : i32
    %c0_i32_0 = arith.constant 0 : i32
    return %arg0, %c0_i32 : i32, i32
  }
  func.func @transform_4(%arg0: i32) -> (i32, i32) {
    %c0_i32 = arith.constant 0 : i32
    %c0_i32_0 = arith.constant 0 : i32
    return %arg0, %c0_i32 : i32, i32
  }
  func.func @transform_5(%arg0: i32) -> (i32, i32) {
    %c0_i32 = arith.constant 0 : i32
    %c0_i32_0 = arith.constant 0 : i32
    return %arg0, %c0_i32 : i32, i32
  }
}

</mosaic_0001>

<llo_original>
// kernel: tpu_custom_call.1
$region0: #{tpu_custom_call.1}
  #allocation0 [shape = 'u32[]', space=smem, size = 0x4, offset = 0x4, fixed_abs, tag = 'smem constant byte address 0x4 - core index']
  #allocation1 [shape = 'u32[144,128]{1,0:T(1,128)}', space=vmem, size = 0x12000, scoped, tag = 'internal scratch']
  %s0 = inlined_call_operand.hbm [shape: f32[16,32], index: 0, kind: input, shape index: {}]
  %s1 = inlined_call_operand.hbm [shape: f32[3,32,32], index: 1, kind: input, shape index: {}]
  %s2 = inlined_call_operand.vmem [shape: f32[3,1,32], index: 2, kind: input, shape index: {}]
  %s3 = inlined_call_operand.hbm [shape: f32[16,32], index: 3, kind: output, shape index: {0}]
  %s4 = inlined_call_operand.hbm [shape: f32[16,32], index: 4, kind: output, shape index: {1}]
  %s5 = inlined_call_operand.hbm [shape: f32[16,32], index: 5, kind: output, shape index: {2}]
  %6 = xla_tuple %s3, %s4, %s5
  %s7 = sld [smem:[#allocation0]]
  $region46: #{tpu_custom_call.1} parent=0
    _
  %s9 = ssub.s32 1, %s7
  %s10 = scalar_select 0, %s9, %s7
  $region1: #{tpu_custom_call.1} parent=0
    #allocation2 [shape = 'u8[8192]{0}', space=vmem, size = 0x2000, scoped, tag = 'input window, operand 0, single buffered']
    #allocation3 [shape = 's32[1]{0}', space=sflag, size = 0x4, scoped, tag = 'scoped memory for tpu_custom_call.1']
    #allocation4 [shape = 's32[1]{0}', space=sflag, size = 0x4, scoped, tag = 'scoped memory for tpu_custom_call.1']
    #allocation5 [shape = 'u8[49152]{0}', space=vmem, size = 0xc000, scoped, tag = 'input window, operand 1, single buffered']
    #allocation6 [shape = 's32[1]{0}', space=sflag, size = 0x4, scoped, tag = 'scoped memory for tpu_custom_call.1']
    #allocation7 [shape = 'u8[8192]{0}', space=vmem, size = 0x2000, scoped, tag = 'output window, operand 0, single buffered']
    #allocation8 [shape = 'u8[8192]{0}', space=vmem, size = 0x2000, scoped, tag = 'output window, operand 1, single buffered']
    #allocation9 [shape = 's32[1]{0}', space=sflag, size = 0x4, scoped, tag = 'scoped memory for tpu_custom_call.1']
    #allocation10 [shape = 'u8[8192]{0}', space=vmem, size = 0x2000, scoped, tag = 'output window, operand 2, single buffered']
    %11 = vsyncpa [#allocation3], 0
    %12 = vsyncpa [#allocation6], 0
    %13 = vsyncpa [#allocation4], 0
    %14 = vsyncpa [#allocation9], 0
    // Predicated region
    $region2: #{tpu_custom_call.1} parent=1 // pred_check
      _
    $region3: #{tpu_custom_call.1} parent=1 // pred_check_branch
      %16 = sbr.rel (0) target = $region5
    $region4: #{tpu_custom_call.1} parent=1 // pred_region
      %s18 = ssub.s32 256, 256
      %19 = vsyncadd [#allocation3], %s18
      %s20 = sshll.u32 [#allocation2], 4
      %s21 = int_to_ptr.vmem [resolvable:$true] %s20
      %26 = dma.hbm_to_vmem [thread:$0]  %s0, 256, %s21, [#allocation3], 128, 128, 8
    $region5: #{tpu_custom_call.1} parent=1 // pred_fallthru
      _
    // Predicated region
    $region6: #{tpu_custom_call.1} parent=1 // pred_check
      _
    $region7: #{tpu_custom_call.1} parent=1 // pred_check_branch
      %28 = sbr.rel (0) target = $region9
    $region8: #{tpu_custom_call.1} parent=1 // pred_region
      %s30 = ssub.s32 1536, 1536
      %31 = vsyncadd [#allocation6], %s30
      %s32 = sshll.u32 [#allocation5], 4
      %s33 = int_to_ptr.vmem [resolvable:$true] %s32
      %38 = dma.hbm_to_vmem [thread:$0]  %s1, 1536, %s33, [#allocation6], 128, 128, 8
    $region9: #{tpu_custom_call.1} parent=1 // pred_fallthru
      _
    // Predicated region
    $region10: #{tpu_custom_call.1} parent=1 // pred_check
      _
    $region11: #{tpu_custom_call.1} parent=1 // pred_check_branch
      %40 = sbr.rel (0) target = $region13
    $region12: #{tpu_custom_call.1} parent=1 // pred_region
      _
    $region13: #{tpu_custom_call.1} parent=1 // pred_fallthru
      _
    // Predicated region
    $region14: #{tpu_custom_call.1} parent=1 // pred_check
      _
    $region15: #{tpu_custom_call.1} parent=1 // pred_check_branch
      %42 = sbr.rel (0) target = $region17
    $region16: #{tpu_custom_call.1} parent=1 // pred_region
      %43 = dma.done [#allocation3], 256
    $region17: #{tpu_custom_call.1} parent=1 // pred_fallthru
      _
    // Predicated region
    $region18: #{tpu_custom_call.1} parent=1 // pred_check
      _
    $region19: #{tpu_custom_call.1} parent=1 // pred_check_branch
      %45 = sbr.rel (0) target = $region21
    $region20: #{tpu_custom_call.1} parent=1 // pred_region
      %46 = dma.done [#allocation6], 1536
    $region21: #{tpu_custom_call.1} parent=1 // pred_fallthru
      _
    %v47 = vld [vmem:[#allocation2] sm:$0xff]
    %v48 = vld [vmem:[#allocation2 + $0x8] sm:$0xff]
    %v49 = vld [vmem:[#allocation5] sm:$0xff]
    %v50 = vld [vmem:[#allocation5 + $0x8] sm:$0xff]
    %v51 = vld [vmem:[#allocation5 + $0x10] sm:$0xff]
    %v52 = vld [vmem:[#allocation5 + $0x18] sm:$0xff]
    %v53 = vld [vmem:[%s2] sm:$0x1]
    %v55 = vlaneseq
    %v56 = vshrl.u32 %v55, 7
    %v57 = vsub.s32 0, %v56
    %v58 = vrot.slane %v53, %v57
    %vm60 = vcmask 261120
    %v62 = vsel %vm60, %v47, 0
    %v65 = vsel %vm60, %v48, 0
    %67 = vmatprep.subr.mxu0 0.0
    %68 = vmatpush1.msra.mxu0 %v49
    %69 = vmatprep.subr.mxu0 0.0
    %70 = vmatpush1.msra.mxu0 %v50
    %71 = vmatprep.subr.mxu0 0.0
    %72 = vmatpush1.msra.mxu0 %v51
    %73 = vmatprep.subr.mxu0 0.0
    %74 = vmatpush1.msra.mxu0 %v52
    %75 = vmatprep.subr.mxu0 0.0
    %76 = vmatpush1.msra.mxu0 0.0
    %77 = vmatprep.subr.mxu0 0.0
    %78 = vmatpush1.msra.mxu0 0.0
    %79 = vmatprep.subr.mxu0 0.0
    %80 = vmatpush1.msra.mxu0 0.0
    %81 = vmatprep.subr.mxu0 0.0
    %82 = vmatpush1.msra.mxu0 0.0
    %83 = vmatprep.subr.mxu0 0.0
    %84 = vmatpush1.msra.mxu0 0.0
    %85 = vmatprep.subr.mxu0 0.0
    %86 = vmatpush1.msra.mxu0 0.0
    %87 = vmatprep.subr.mxu0 0.0
    %88 = vmatpush1.msra.mxu0 0.0
    %89 = vmatprep.subr.mxu0 0.0
    %90 = vmatpush1.msra.mxu0 0.0
    %91 = vmatprep.subr.mxu0 0.0
    %92 = vmatpush1.msra.mxu0 0.0
    %93 = vmatprep.subr.mxu0 0.0
    %94 = vmatpush1.msra.mxu0 0.0
    %95 = vmatprep.subr.mxu0 0.0
    %96 = vmatpush1.msra.mxu0 0.0
    %97 = vmatprep.subr.mxu0 0.0
    %98 = vmatpush1.msra.mxu0 0.0
    %99 = vmatprep.subr.mxu0 0.0
    %100 = vmatpush1.msra.mxu0 0.0
    %101 = vmatprep.subr.mxu0 0.0
    %102 = vmatpush1.msra.mxu0 0.0
    %103 = vmatprep.subr.mxu0 0.0
    %104 = vmatpush1.msra.mxu0 0.0
    %105 = vmatprep.subr.mxu0 0.0
    %106 = vmatpush1.msra.mxu0 0.0
    %107 = vmatprep.subr.mxu0 0.0
    %108 = vmatpush1.msra.mxu0 0.0
    %109 = vmatprep.subr.mxu0 0.0
    %110 = vmatpush1.msra.mxu0 0.0
    %111 = vmatprep.subr.mxu0 0.0
    %112 = vmatpush1.msra.mxu0 0.0
    %113 = vmatprep.subr.mxu0 0.0
    %114 = vmatpush1.msra.mxu0 0.0
    %115 = vmatprep.subr.mxu0 0.0
    %116 = vmatpush1.msra.mxu0 0.0
    %117 = vmatprep.subr.mxu0 0.0
    %118 = vmatpush1.msra.mxu0 0.0
    %119 = vmatprep.subr.mxu0 0.0
    %120 = vmatpush1.msra.mxu0 0.0
    %121 = vmatprep.subr.mxu0 0.0
    %122 = vmatpush1.msra.mxu0 0.0
    %123 = vmatprep.subr.mxu0 0.0
    %124 = vmatpush1.msra.mxu0 0.0
    %125 = vmatprep.subr.mxu0 0.0
    %126 = vmatpush1.msra.mxu0 0.0
    %127 = vmatprep.subr.mxu0 0.0
    %128 = vmatpush1.msra.mxu0 0.0
    %129 = vmatprep.subr.mxu0 0.0
    %130 = vmatpush1.msra.mxu0 0.0
    %131 = vmatprep.mubr.f32.mxu0 0.0
    %132 = vmatmul.mubr.f32.gmra.mrb[0].mxu0 %v62
    %v133 = vpop.f32.mrb[0].mxu0
    %v134 = vadd.f32 %v58, %v133
    %v135 = vpop.f32.mrb[0].mxu0
    %136 = vmatprep.mubr.f32.mxu0 0.0
    %137 = vmatmul.mubr.f32.gmra.mrb[0].mxu0 %v65
    %v138 = vpop.f32.mrb[0].mxu0
    %v139 = vadd.f32 %v58, %v138
    %v140 = vpop.f32.mrb[0].mxu0
    %141 = vdwg.mxu0
    %142 = vst.msk [vmem:[#allocation7] sm:$0xff] %vm60, %v134
    %143 = vst.msk [vmem:[#allocation7 + $0x8] sm:$0xff] %vm60, %v139
    %s144 = scalar_lea.vmem [#allocation5], 32
    %v145 = vld [vmem:[%s144] sm:$0xff]
    %v146 = vld [vmem:[%s144 + $0x8] sm:$0xff]
    %v147 = vld [vmem:[%s144 + $0x10] sm:$0xff]
    %v148 = vld [vmem:[%s144 + $0x18] sm:$0xff]
    %s149 = scalar_lea.vmem %s2, 1
    %v150 = vld [vmem:[%s149] sm:$0x1]
    %v152 = vlaneseq
    %v153 = vshrl.u32 %v152, 7
    %v154 = vsub.s32 0, %v153
    %v155 = vrot.slane %v150, %v154
    %157 = vmatprep.subr.mxu0 0.0
    %158 = vmatpush1.msra.mxu0 %v145
    %159 = vmatprep.subr.mxu0 0.0
    %160 = vmatpush1.msra.mxu0 %v146
    %161 = vmatprep.subr.mxu0 0.0
    %162 = vmatpush1.msra.mxu0 %v147
    %163 = vmatprep.subr.mxu0 0.0
    %164 = vmatpush1.msra.mxu0 %v148
    %165 = vmatprep.subr.mxu0 0.0
    %166 = vmatpush1.msra.mxu0 0.0
    %167 = vmatprep.subr.mxu0 0.0
    %168 = vmatpush1.msra.mxu0 0.0
    %169 = vmatprep.subr.mxu0 0.0
    %170 = vmatpush1.msra.mxu0 0.0
    %171 = vmatprep.subr.mxu0 0.0
    %172 = vmatpush1.msra.mxu0 0.0
    %173 = vmatprep.subr.mxu0 0.0
    %174 = vmatpush1.msra.mxu0 0.0
    %175 = vmatprep.subr.mxu0 0.0
    %176 = vmatpush1.msra.mxu0 0.0
    %177 = vmatprep.subr.mxu0 0.0
    %178 = vmatpush1.msra.mxu0 0.0
    %179 = vmatprep.subr.mxu0 0.0
    %180 = vmatpush1.msra.mxu0 0.0
    %181 = vmatprep.subr.mxu0 0.0
    %182 = vmatpush1.msra.mxu0 0.0
    %183 = vmatprep.subr.mxu0 0.0
    %184 = vmatpush1.msra.mxu0 0.0
    %185 = vmatprep.subr.mxu0 0.0
    %186 = vmatpush1.msra.mxu0 0.0
    %187 = vmatprep.subr.mxu0 0.0
    %188 = vmatpush1.msra.mxu0 0.0
    %189 = vmatprep.subr.mxu0 0.0
    %190 = vmatpush1.msra.mxu0 0.0
    %191 = vmatprep.subr.mxu0 0.0
    %192 = vmatpush1.msra.mxu0 0.0
    %193 = vmatprep.subr.mxu0 0.0
    %194 = vmatpush1.msra.mxu0 0.0
    %195 = vmatprep.subr.mxu0 0.0
    %196 = vmatpush1.msra.mxu0 0.0
    %197 = vmatprep.subr.mxu0 0.0
    %198 = vmatpush1.msra.mxu0 0.0
    %199 = vmatprep.subr.mxu0 0.0
    %200 = vmatpush1.msra.mxu0 0.0
    %201 = vmatprep.subr.mxu0 0.0
    %202 = vmatpush1.msra.mxu0 0.0
    %203 = vmatprep.subr.mxu0 0.0
    %204 = vmatpush1.msra.mxu0 0.0
    %205 = vmatprep.subr.mxu0 0.0
    %206 = vmatpush1.msra.mxu0 0.0
    %207 = vmatprep.subr.mxu0 0.0
    %208 = vmatpush1.msra.mxu0 0.0
    %209 = vmatprep.subr.mxu0 0.0
    %210 = vmatpush1.msra.mxu0 0.0
    %211 = vmatprep.subr.mxu0 0.0
    %212 = vmatpush1.msra.mxu0 0.0
    %213 = vmatprep.subr.mxu0 0.0
    %214 = vmatpush1.msra.mxu0 0.0
    %215 = vmatprep.subr.mxu0 0.0
    %216 = vmatpush1.msra.mxu0 0.0
    %217 = vmatprep.subr.mxu0 0.0
    %218 = vmatpush1.msra.mxu0 0.0
    %219 = vmatprep.subr.mxu0 0.0
    %220 = vmatpush1.msra.mxu0 0.0
    %221 = vmatprep.mubr.f32.mxu0 0.0
    %222 = vmatmul.mubr.f32.gmra.mrb[0].mxu0 %v62
    %v223 = vpop.f32.mrb[0].mxu0
    %v224 = vadd.f32 %v155, %v223
    %v225 = vpop.f32.mrb[0].mxu0
    %226 = vmatprep.mubr.f32.mxu0 0.0
    %227 = vmatmul.mubr.f32.gmra.mrb[0].mxu0 %v65
    %v228 = vpop.f32.mrb[0].mxu0
    %v229 = vadd.f32 %v155, %v228
    %v230 = vpop.f32.mrb[0].mxu0
    %231 = vdwg.mxu0
    %232 = vst.msk [vmem:[#allocation8] sm:$0xff] %vm60, %v224
    %233 = vst.msk [vmem:[#allocation8 + $0x8] sm:$0xff] %vm60, %v229
    %s234 = scalar_lea.vmem [#allocation5], 64
    %v235 = vld [vmem:[%s234] sm:$0xff]
    %v236 = vld [vmem:[%s234 + $0x8] sm:$0xff]
    %v237 = vld [vmem:[%s234 + $0x10] sm:$0xff]
    %v238 = vld [vmem:[%s234 + $0x18] sm:$0xff]
    %s239 = scalar_lea.vmem %s2, 2
    %v240 = vld [vmem:[%s239] sm:$0x1]
    %v242 = vlaneseq
    %v243 = vshrl.u32 %v242, 7
    %v244 = vsub.s32 0, %v243
    %v245 = vrot.slane %v240, %v244
    %247 = vmatprep.subr.mxu0 0.0
    %248 = vmatpush1.msra.mxu0 %v235
    %249 = vmatprep.subr.mxu0 0.0
    %250 = vmatpush1.msra.mxu0 %v236
    %251 = vmatprep.subr.mxu0 0.0
    %252 = vmatpush1.msra.mxu0 %v237
    %253 = vmatprep.subr.mxu0 0.0
    %254 = vmatpush1.msra.mxu0 %v238
    %255 = vmatprep.subr.mxu0 0.0
    %256 = vmatpush1.msra.mxu0 0.0
    %257 = vmatprep.subr.mxu0 0.0
    %258 = vmatpush1.msra.mxu0 0.0
    %259 = vmatprep.subr.mxu0 0.0
    %260 = vmatpush1.msra.mxu0 0.0
    %261 = vmatprep.subr.mxu0 0.0
    %262 = vmatpush1.msra.mxu0 0.0
    %263 = vmatprep.subr.mxu0 0.0
    %264 = vmatpush1.msra.mxu0 0.0
    %265 = vmatprep.subr.mxu0 0.0
    %266 = vmatpush1.msra.mxu0 0.0
    %267 = vmatprep.subr.mxu0 0.0
    %268 = vmatpush1.msra.mxu0 0.0
    %269 = vmatprep.subr.mxu0 0.0
    %270 = vmatpush1.msra.mxu0 0.0
    %271 = vmatprep.subr.mxu0 0.0
    %272 = vmatpush1.msra.mxu0 0.0
    %273 = vmatprep.subr.mxu0 0.0
    %274 = vmatpush1.msra.mxu0 0.0
    %275 = vmatprep.subr.mxu0 0.0
    %276 = vmatpush1.msra.mxu0 0.0
    %277 = vmatprep.subr.mxu0 0.0
    %278 = vmatpush1.msra.mxu0 0.0
    %279 = vmatprep.subr.mxu0 0.0
    %280 = vmatpush1.msra.mxu0 0.0
    %281 = vmatprep.subr.mxu0 0.0
    %282 = vmatpush1.msra.mxu0 0.0
    %283 = vmatprep.subr.mxu0 0.0
    %284 = vmatpush1.msra.mxu0 0.0
    %285 = vmatprep.subr.mxu0 0.0
    %286 = vmatpush1.msra.mxu0 0.0
    %287 = vmatprep.subr.mxu0 0.0
    %288 = vmatpush1.msra.mxu0 0.0
    %289 = vmatprep.subr.mxu0 0.0
    %290 = vmatpush1.msra.mxu0 0.0
    %291 = vmatprep.subr.mxu0 0.0
    %292 = vmatpush1.msra.mxu0 0.0
    %293 = vmatprep.subr.mxu0 0.0
    %294 = vmatpush1.msra.mxu0 0.0
    %295 = vmatprep.subr.mxu0 0.0
    %296 = vmatpush1.msra.mxu0 0.0
    %297 = vmatprep.subr.mxu0 0.0
    %298 = vmatpush1.msra.mxu0 0.0
    %299 = vmatprep.subr.mxu0 0.0
    %300 = vmatpush1.msra.mxu0 0.0
    %301 = vmatprep.subr.mxu0 0.0
    %302 = vmatpush1.msra.mxu0 0.0
    %303 = vmatprep.subr.mxu0 0.0
    %304 = vmatpush1.msra.mxu0 0.0
    %305 = vmatprep.subr.mxu0 0.0
    %306 = vmatpush1.msra.mxu0 0.0
    %307 = vmatprep.subr.mxu0 0.0
    %308 = vmatpush1.msra.mxu0 0.0
    %309 = vmatprep.subr.mxu0 0.0
    %310 = vmatpush1.msra.mxu0 0.0
    %311 = vmatprep.mubr.f32.mxu0 0.0
    %312 = vmatmul.mubr.f32.gmra.mrb[0].mxu0 %v62
    %v313 = vpop.f32.mrb[0].mxu0
    %v314 = vadd.f32 %v245, %v313
    %v315 = vpop.f32.mrb[0].mxu0
    %316 = vmatprep.mubr.f32.mxu0 0.0
    %317 = vmatmul.mubr.f32.gmra.mrb[0].mxu0 %v65
    %v318 = vpop.f32.mrb[0].mxu0
    %v319 = vadd.f32 %v245, %v318
    %v320 = vpop.f32.mrb[0].mxu0
    %321 = vdwg.mxu0
    %322 = vst.msk [vmem:[#allocation10] sm:$0xff] %vm60, %v314
    %323 = vst.msk [vmem:[#allocation10 + $0x8] sm:$0xff] %vm60, %v319
    // Predicated region
    $region22: #{tpu_custom_call.1} parent=1 // pred_check
      _
    $region23: #{tpu_custom_call.1} parent=1 // pred_check_branch
      %325 = sbr.rel (0) target = $region25
    $region24: #{tpu_custom_call.1} parent=1 // pred_region
      %s327 = ssub.s32 256, 256
      %328 = vsyncadd [#allocation4], %s327
      %s329 = sshll.u32 [#allocation7], 4
      %s330 = int_to_ptr.vmem [resolvable:$true] %s329
      %335 = dma.vmem_to_hbm [thread:$0]  %s330, 256, %s3, [#allocation4], 128, 128, 8
    $region25: #{tpu_custom_call.1} parent=1 // pred_fallthru
      _
    // Predicated region
    $region26: #{tpu_custom_call.1} parent=1 // pred_check
      _
    $region27: #{tpu_custom_call.1} parent=1 // pred_check_branch
      %337 = sbr.rel (0) target = $region29
    $region28: #{tpu_custom_call.1} parent=1 // pred_region
      %s339 = ssub.s32 256, 256
      %340 = vsyncadd [#allocation9], %s339
      %s341 = sshll.u32 [#allocation8], 4
      %s342 = int_to_ptr.vmem [resolvable:$true] %s341
      %347 = dma.vmem_to_hbm [thread:$0]  %s342, 256, %s4, [#allocation9], 128, 128, 8
    $region29: #{tpu_custom_call.1} parent=1 // pred_fallthru
      _
    // Predicated region
    $region30: #{tpu_custom_call.1} parent=1 // pred_check
      _
    $region31: #{tpu_custom_call.1} parent=1 // pred_check_branch
      %349 = sbr.rel (0) target = $region33
    $region32: #{tpu_custom_call.1} parent=1 // pred_region
      %s351 = ssub.s32 256, 256
      %352 = vsyncadd [#allocation9], %s351
      %s353 = sshll.u32 [#allocation10], 4
      %s354 = int_to_ptr.vmem [resolvable:$true] %s353
      %359 = dma.vmem_to_hbm [thread:$0]  %s354, 256, %s5, [#allocation9], 128, 128, 8
    $region33: #{tpu_custom_call.1} parent=1 // pred_fallthru
      _
    // Predicated region
    $region34: #{tpu_custom_call.1} parent=1 // pred_check
      _
    $region35: #{tpu_custom_call.1} parent=1 // pred_check_branch
      %361 = sbr.rel (0) target = $region37
    $region36: #{tpu_custom_call.1} parent=1 // pred_region
      %362 = dma.done [#allocation4], 256
    $region37: #{tpu_custom_call.1} parent=1 // pred_fallthru
      _
    // Predicated region
    $region38: #{tpu_custom_call.1} parent=1 // pred_check
      _
    $region39: #{tpu_custom_call.1} parent=1 // pred_check_branch
      %364 = sbr.rel (0) target = $region41
    $region40: #{tpu_custom_call.1} parent=1 // pred_region
      %365 = dma.done [#allocation9], 256
    $region41: #{tpu_custom_call.1} parent=1 // pred_fallthru
      _
    // Predicated region
    $region42: #{tpu_custom_call.1} parent=1 // pred_check
      _
    $region43: #{tpu_custom_call.1} parent=1 // pred_check_branch
      %367 = sbr.rel (0) target = $region45
    $region44: #{tpu_custom_call.1} parent=1 // pred_region
      %368 = dma.done [#allocation9], 256
    $region45: #{tpu_custom_call.1} parent=1 // pred_fallthru
      _
    %369 = vsyncpa [#allocation3], 1
    %370 = vsyncpa [#allocation6], 1
    %371 = vsyncpa [#allocation4], 1
    %372 = vsyncpa [#allocation9], 1

</llo_original>
